<compile_context>
chip_gen: v7x
topology: tpu7x:2x2x1
jax: 0.10.0
libtpu: 0.0.40
codegen_flags: <defaults>
</compile_context>

<pallas_src>
from functools import partial

import jax
import jax.numpy as jnp
from jax.experimental import pallas as pl
from jax.experimental.pallas import tpu as pltpu


# ----------------------------------------------------------------------------- shared conv math
def _conv_residual_lrelu(x_ref, halo_ref, w_ref, b_ref, *, d, compute_dtype):
    """Folded (conv2∘conv1) + residual + leaky_relu(0.2) for one (C, t_blk) tile.

    x_ref    : (1, C, t_blk)   activation tile (input dtype)
    halo_ref : (1, 1, C, 2d)   [left | right] out-of-tile columns for this tile
    w_ref    : (3, C, C)       folded taps  W_eff_k = W2 @ W1_k   (compute_dtype)
    b_ref    : (C, 1)          folded bias  W2 @ b1 + b2          (f32)
    returns  : (C, t_blk) f32  pre-norm activations
    """
    x = x_ref[0]                       # (C, t_blk)
    halo = halo_ref[0, 0]              # (C, 2d)
    t_blk = x.shape[1]
    xl = halo[:, :d]                   # columns [t0-d, t0)
    xr = halo[:, d:]                   # columns [t0+t_blk, t0+t_blk+d)

    # Tap inputs: column j of tap k is x_global[j + (k-1)*d]  (Conv1d k=3, dilation=d,
    # padding=d).  Halos supply the columns that fall outside this tile.
    x_m1 = jnp.concatenate([xl, x[:, : t_blk - d]], axis=1)    # x shifted by -d
    x_p1 = jnp.concatenate([x[:, d:], xr], axis=1)             # x shifted by +d

    acc = jnp.dot(w_ref[0], x_m1.astype(compute_dtype),
                  preferred_element_type=jnp.float32)
    acc = acc + jnp.dot(w_ref[1], x.astype(compute_dtype),
                        preferred_element_type=jnp.float32)
    acc = acc + jnp.dot(w_ref[2], x_p1.astype(compute_dtype),
                        preferred_element_type=jnp.float32)
    acc = acc + b_ref[...]                         # (C, 1) broadcast over lanes
    acc = acc + x.astype(jnp.float32)              # residual (full input precision)
    return jnp.where(acc > 0.0, acc, 0.2 * acc)    # leaky_relu(0.2)


# ----------------------------------------------------------------------------- kernels
def conv_stats_kernel(x_ref, halo_ref, w_ref, b_ref, stats_ref, s1_ref, s2_ref, *,
                      d, t_blk, t_valid, needs_mask, compute_dtype):
    """Pass 1: recomputable conv+residual+lrelu, streamed BN partial sums.

    Statistics are accumulated in persistent VMEM scratch across the time axis
    (grid axis 1, "arbitrary") and written to HBM once per batch element.
    """
    t = pl.program_id(1)

    @pl.when(t == 0)
    def _():
        s1_ref[...] = jnp.zeros_like(s1_ref)
        s2_ref[...] = jnp.zeros_like(s2_ref)

    h = _conv_residual_lrelu(x_ref, halo_ref, w_ref, b_ref,
                             d=d, compute_dtype=compute_dtype)

    if needs_mask:  # exclude zero-padded tail columns from the batch statistics
        col = t * t_blk + jax.lax.broadcasted_iota(jnp.int32, h.shape, 1)
        h = jnp.where(col < t_valid, h, 0.0)

    s1_ref[...] += jnp.sum(h, axis=1, keepdims=True)
    s2_ref[...] += jnp.sum(h * h, axis=1, keepdims=True)

    @pl.when(t == pl.num_programs(1) - 1)
    def _():
        stats_ref[0] = jnp.concatenate([s1_ref[...], s2_ref[...]], axis=1)  # (C, 2)


def bn_apply_kernel(x_ref, halo_ref, w_ref, b_ref, scale_ref, shift_ref, out_ref, *,
                    d, compute_dtype):
    """Pass 2: recompute the folded conv (cheap) and apply the folded BN affine.
    Avoids any full-size f32 intermediate round-trip through HBM."""
    h = _conv_residual_lrelu(x_ref, halo_ref, w_ref, b_ref,
                             d=d, compute_dtype=compute_dtype)
    out_ref[0] = (h * scale_ref[...] + shift_ref[...]).astype(out_ref.dtype)


# ----------------------------------------------------------------------------- tiling helpers
def _vmem_params():
    """(per-tile working-set budget, vmem_limit_bytes), sized for the local part."""
    cap = None
    try:
        cap = getattr(pltpu.get_tpu_info(), "vmem_capacity_bytes", None)
    except Exception:
        cap = None
    if cap is None:
        cap = 64 * 1024 * 1024                      # assume the smallest (v7x) part
    if cap >= 96 * 1024 * 1024:                     # v5e / v6e: 128 MiB physical
        return 32 * 1024 * 1024, 80 * 1024 * 1024
    return 18 * 1024 * 1024, 48 * 1024 * 1024       # v7x: 64 MiB physical


def _pick_time_block(T, C, in_itemsize, out_itemsize, budget_bytes, cap=2048):
    """Largest lane-dense (multiple-of-128) time block whose double-buffered
    x-in / y-out blocks, weights and f32 temporaries fit the VMEM budget.
    Returns (t_blk, T_pad); T is padded up to a multiple of t_blk if ragged."""
    if T <= 256:                                     # small: one full-extent block
        return T, T
    fixed = 2 * 3 * C * C * 4 + 8 * C * 4            # weights (dbl-buffered) + vectors
    per_col = C * (2 * in_itemsize + 2 * out_itemsize + 6 * 4)  # blocks + f32 temps
    avail = max(budget_bytes - fixed, 128 * per_col)
    t_blk = max(128, min(cap, (avail // per_col) // 128 * 128))
    t_blk = min(t_blk, -(-T // 128) * 128)           # never exceed padded T
    t_pad = -(-T // t_blk) * t_blk
    return int(t_blk), int(t_pad)


def _build_halos(x_pad, n_t, t_blk, d):
    """Per-tile halo columns, (N, n_t, C, 2d): [x[t0-d:t0] | x[t0+t_blk:t0+t_blk+d]],
    zero-filled at the sequence boundaries (== the conv's zero padding).
    Only thin column slices of x are touched — negligible HBM traffic."""
    N, C, _ = x_pad.shape
    chunks = x_pad.reshape(N, C, n_t, t_blk)
    zeros = jnp.zeros((N, C, 1, d), x_pad.dtype)
    left = jnp.concatenate([zeros, chunks[:, :, :-1, t_blk - d:]], axis=2)
    right = jnp.concatenate([chunks[:, :, 1:, :d], zeros], axis=2)
    return jnp.concatenate([left, right], axis=-1).transpose(0, 2, 1, 3)


# ----------------------------------------------------------------------------- wrapper
def block_forward(x, params, dilation, *, compute_dtype=jnp.float32):
    """x: (N, C, T). Returns (N, C, T). compute_dtype=bf16 uses bf16 MXU operands
    (recommended on v5e/v6e); residual, bias and BN math stay f32.  Passing a bf16
    `x` additionally halves the activation DMA bytes of this memory-bound kernel."""
    N, C, T = x.shape
    d = int(dilation)

    # --- fold conv2 (1x1) into conv1; stack the 3 dilated taps -----------------------
    w1 = params["w1"]                                    # (C, C, 3)
    w2 = params["w2"][:, :, 0]                           # (C, C)
    w_eff = jnp.stack([w2 @ w1[:, :, k] for k in range(3)], axis=0).astype(compute_dtype)
    b_eff = (w2 @ params["b1"] + params["b2"]).reshape(C, 1).astype(jnp.float32)

    # --- tiling ----------------------------------------------------------------------
    budget, vmem_limit = _vmem_params()
    t_blk, t_pad = _pick_time_block(T, C, x.dtype.itemsize, x.dtype.itemsize, budget)
    assert 0 < d < t_blk, f"dilation {d} must be smaller than the time block {t_blk}"
    n_t = t_pad // t_blk
    needs_mask = t_pad != T
    x_pad = x if not needs_mask else jnp.pad(x, ((0, 0), (0, 0), (0, t_pad - T)))
    halos = _build_halos(x_pad, n_t, t_blk, d)           # (N, n_t, C, 2d), tiny
    grid = (N, n_t)

    conv_flops = int(2 * 3 * C * C * N * t_pad + 10 * N * C * t_pad)
    act_bytes = int(N * C * t_pad * x.dtype.itemsize)
    small_bytes = int(halos.size * halos.dtype.itemsize
                      + w_eff.size * w_eff.dtype.itemsize + 8 * C)

    # TODO(synk): sweep pipeline_mode=pl.Buffered(3) on the x stream for v7x where the
    # tiny per-tile compute can leave DMA latency exposed.

    # ---------------- pass 1: conv + residual + leaky_relu -> streamed BN partials ---
    stats = pl.pallas_call(
        partial(conv_stats_kernel, d=d, t_blk=t_blk, t_valid=T,
                needs_mask=needs_mask, compute_dtype=compute_dtype),
        grid=grid,
        in_specs=[
            pl.BlockSpec((1, C, t_blk), lambda n, t: (n, 0, t)),
            pl.BlockSpec((1, 1, C, 2 * d), lambda n, t: (n, t, 0, 0)),
            pl.BlockSpec((3, C, C), lambda n, t: (0, 0, 0)),
            pl.BlockSpec((C, 1), lambda n, t: (0, 0)),
        ],
        out_specs=pl.BlockSpec((1, C, 2), lambda n, t: (n, 0, 0)),
        out_shape=jax.ShapeDtypeStruct((N, C, 2), jnp.float32),
        scratch_shapes=[pltpu.VMEM((C, 1), jnp.float32),
                        pltpu.VMEM((C, 1), jnp.float32)],
        compiler_params=pltpu.CompilerParams(
            dimension_semantics=("parallel", "arbitrary"),   # t carries the BN sums
            vmem_limit_bytes=vmem_limit),
        cost_estimate=pl.CostEstimate(flops=conv_flops, transcendentals=0,
                                      bytes_accessed=act_bytes + small_bytes),
    )(x_pad, halos, w_eff, b_eff)

    # ---------------- finalize BatchNorm (training-mode biased batch stats) ----------
    # TODO(synk): E[x^2]-mean^2 in f32 can lose precision if |mean| >> std over huge
    # N*T; a shifted / (count, mean, M2) merge would be more robust.
    count = float(N * T)
    sums = jnp.sum(stats, axis=0)                            # (C, 2)
    mean = sums[:, 0] / count
    var = jnp.maximum(sums[:, 1] / count - mean * mean, 0.0)  # biased variance
    inv = jax.lax.rsqrt(var + 1e-5)
    scale = (params["gamma"] * inv).reshape(C, 1).astype(jnp.float32)
    shift = (params["beta"] - mean * params["gamma"] * inv).reshape(C, 1).astype(jnp.float32)

    # ---------------- pass 2: recompute conv, apply folded BN scale/shift ------------
    out = pl.pallas_call(
        partial(bn_apply_kernel, d=d, compute_dtype=compute_dtype),
        grid=grid,
        in_specs=[
            pl.BlockSpec((1, C, t_blk), lambda n, t: (n, 0, t)),
            pl.BlockSpec((1, 1, C, 2 * d), lambda n, t: (n, t, 0, 0)),
            pl.BlockSpec((3, C, C), lambda n, t: (0, 0, 0)),
            pl.BlockSpec((C, 1), lambda n, t: (0, 0)),
            pl.BlockSpec((C, 1), lambda n, t: (0, 0)),
            pl.BlockSpec((C, 1), lambda n, t: (0, 0)),
        ],
        out_specs=pl.BlockSpec((1, C, t_blk), lambda n, t: (n, 0, t)),
        out_shape=jax.ShapeDtypeStruct((N, C, t_pad), x.dtype),
        compiler_params=pltpu.CompilerParams(
            dimension_semantics=("parallel", "parallel"),
            vmem_limit_bytes=vmem_limit),
        cost_estimate=pl.CostEstimate(flops=conv_flops + 2 * N * C * t_pad,
                                      transcendentals=0,
                                      bytes_accessed=2 * act_bytes + small_bytes),
    )(x_pad, halos, w_eff, b_eff, scale, shift)

    if needs_mask:
        out = out[:, :, :T]
    return out


# ----------------------------------------------------------------------------- reference
def reference_forward(x, params, dilation):
    """Pure-JAX reference (independent of the kernel) for validation."""
    w1, b1 = params["w1"], params["b1"]
    w2, b2 = params["w2"], params["b2"]
    gamma, beta = params["gamma"], params["beta"]
    dn = ("NCH", "OIH", "NCH")
    y = jax.lax.conv_general_dilated(
        x, w1, window_strides=(1,), padding=[(dilation, dilation)],
        rhs_dilation=(dilation,), dimension_numbers=dn)
    y = y + b1[None, :, None]
    y = jax.lax.conv_general_dilated(
        y, w2, window_strides=(1,), padding=[(0, 0)], dimension_numbers=dn)
    y = y + b2[None, :, None]
    y = y + x
    y = jnp.where(y > 0, y, 0.2 * y)
    mean = jnp.mean(y, axis=(0, 2), keepdims=True)
    var = jnp.mean((y - mean) ** 2, axis=(0, 2), keepdims=True)
    y = (y - mean) * jax.lax.rsqrt(var + 1e-5)
    return y * gamma[None, :, None] + beta[None, :, None]


def init_params(key, channels):
    """Deterministic synthetic init (shapes match nn.Conv1d / nn.BatchNorm1d)."""
    k1, k2, k3, k4 = jax.random.split(key, 4)
    scale1 = 1.0 / jnp.sqrt(channels * 3.0)
    scale2 = 1.0 / jnp.sqrt(channels * 1.0)
    return {
        "w1": jax.random.uniform(k1, (channels, channels, 3), jnp.float32,
                                 -scale1, scale1),
        "b1": jax.random.uniform(k2, (channels,), jnp.float32, -scale1, scale1),
        "w2": jax.random.uniform(k3, (channels, channels, 1), jnp.float32,
                                 -scale2, scale2),
        "b2": jax.random.uniform(k4, (channels,), jnp.float32, -scale2, scale2),
        # BatchNorm1d defaults: weight=1, bias=0 (training mode -> batch stats).
        "gamma": jnp.ones((channels,), jnp.float32),
        "beta": jnp.zeros((channels,), jnp.float32),
    }
    # TODO(synk): BatchNorm running_mean/var buffer updates (a training side effect)
    # are not reproduced; forward output in training mode does not depend on them.


if __name__ == "__main__":
    key = jax.random.PRNGKey(0)

    cases = [
        (2, 4, 16, 2),     # module-sized toy case, single tile
        (2, 8, 4096, 3),   # multi-tile time grid: cross-tile halos + streamed BN accum
        (2, 8, 300, 2),    # ragged T: padding + masked statistics + output slice
    ]
    for (N, C, T, dilation) in cases:
        kx, kp, key = jax.random.split(key, 3)
        x = jax.random.normal(kx, (N, C, T), jnp.float32)
        params = init_params(kp, C)
        ref = reference_forward(x, params, dilation)

        out = jax.block_until_ready(block_forward(x, params, dilation))
        assert out.shape == (N, C, T)
        assert jnp.allclose(out, ref, atol=1e-4, rtol=1e-4), (
            f"f32 max abs err {jnp.max(jnp.abs(out - ref))}")

        # bf16-MXU path (v5e/v6e recommendation): only matmul operands are bf16,
        # accumulation / residual / BN stay f32, so error stays at bf16 rounding level.
        out_bf = jax.block_until_ready(
            block_forward(x, params, dilation, compute_dtype=jnp.bfloat16))
        assert jnp.allclose(out_bf, ref, atol=1e-1, rtol=5e-2), (
            f"bf16 max abs err {jnp.max(jnp.abs(out_bf - ref))}")

    print("KERNEL_OK")
</pallas_src>

<mosaic_0001>
module attributes {stable_mosaic.version = 11 : i64} {
  func.func @conv_stats_kernel(%arg0: i32, %arg1: i32, %arg2: memref<1x4x16xf32, #tpu.memory_space<vmem>>, %arg3: memref<1x1x4x4xf32, #tpu.memory_space<vmem>>, %arg4: memref<3x4x4xf32, #tpu.memory_space<vmem>>, %arg5: memref<4x1xf32, #tpu.memory_space<vmem>>, %arg6: memref<1x4x2xf32, #tpu.memory_space<vmem>>, %arg7: memref<4x1xf32, #tpu.memory_space<vmem>>, %arg8: memref<4x1xf32, #tpu.memory_space<vmem>>) attributes {dimension_semantics = [#tpu.dimension_semantics<parallel>, #tpu.dimension_semantics<arbitrary>], iteration_bounds = array<i64: 2, 1>, scalar_prefetch = 0 : i64, scratch_operands = 2 : i64, tpu.core_type = #tpu.core_type<tc>, window_params = [{transform_indices = @transform_0, window_bounds = array<i64: 1, 4, 16>}, {transform_indices = @transform_1, window_bounds = array<i64: 1, 1, 4, 4>}, {pipeline_mode = #tpu.pipeline_mode<synchronous>, transform_indices = @transform_2, window_bounds = array<i64: 3, 4, 4>}, {pipeline_mode = #tpu.pipeline_mode<synchronous>, transform_indices = @transform_3, window_bounds = array<i64: 4, 1>}, {transform_indices = @transform_4, window_bounds = array<i64: 1, 4, 2>}]} {
    %c0_i32 = arith.constant 0 : i32
    %0 = arith.cmpi eq, %arg1, %c0_i32 : i32
    %1 = arith.extui %0 : i1 to i32
    %c0_i32_0 = arith.constant 0 : i32
    %2 = arith.cmpi ne, %1, %c0_i32_0 : i32
    scf.if %2 {
      %cst_32 = arith.constant 0.000000e+00 : f32
      %47 = vector.broadcast %cst_32 : f32 to vector<4x1xf32>
      %c0_33 = arith.constant 0 : index
      %c0_34 = arith.constant 0 : index
      %48 = vector.load %arg7[%c0_33, %c0_34] : memref<4x1xf32, #tpu.memory_space<vmem>>, vector<4x1xf32>
      tpu.vector_store %arg7[%c0_33, %c0_34], %47 {strides = array<i32>} : memref<4x1xf32, #tpu.memory_space<vmem>>, vector<4x1xf32>,
      %cst_35 = arith.constant 0.000000e+00 : f32
      %49 = vector.broadcast %cst_35 : f32 to vector<4x1xf32>
      %c0_36 = arith.constant 0 : index
      %c0_37 = arith.constant 0 : index
      %50 = vector.load %arg8[%c0_36, %c0_37] : memref<4x1xf32, #tpu.memory_space<vmem>>, vector<4x1xf32>
      tpu.vector_store %arg8[%c0_36, %c0_37], %49 {strides = array<i32>} : memref<4x1xf32, #tpu.memory_space<vmem>>, vector<4x1xf32>,
    } else {
    }
    %c0 = arith.constant 0 : index
    %c0_1 = arith.constant 0 : index
    %c0_2 = arith.constant 0 : index
    %3 = vector.load %arg2[%c0, %c0_1, %c0_2] : memref<1x4x16xf32, #tpu.memory_space<vmem>>, vector<1x4x16xf32>
    %4 = vector.shape_cast %3 : vector<1x4x16xf32> to vector<4x16xf32>
    %c0_3 = arith.constant 0 : index
    %c0_4 = arith.constant 0 : index
    %c0_5 = arith.constant 0 : index
    %c0_6 = arith.constant 0 : index
    %5 = vector.load %arg3[%c0_3, %c0_4, %c0_5, %c0_6] : memref<1x1x4x4xf32, #tpu.memory_space<vmem>>, vector<1x1x4x4xf32>
    %6 = vector.shape_cast %5 : vector<1x1x4x4xf32> to vector<4x4xf32>
    %7 = vector.extract_strided_slice %6 {offsets = [0, 0], sizes = [4, 2], strides = [1, 1]} : vector<4x4xf32> to vector<4x2xf32>
    %8 = vector.extract_strided_slice %6 {offsets = [0, 2], sizes = [4, 2], strides = [1, 1]} : vector<4x4xf32> to vector<4x2xf32>
    %9 = vector.extract_strided_slice %4 {offsets = [0, 0], sizes = [4, 14], strides = [1, 1]} : vector<4x16xf32> to vector<4x14xf32>
    %10 = tpu.concatenate %7, %9 in 1 : vector<4x2xf32>, vector<4x14xf32> -> vector<4x16xf32>
    %11 = vector.extract_strided_slice %4 {offsets = [0, 2], sizes = [4, 14], strides = [1, 1]} : vector<4x16xf32> to vector<4x14xf32>
    %12 = tpu.concatenate %11, %8 in 1 : vector<4x14xf32>, vector<4x2xf32> -> vector<4x16xf32>
    %c0_7 = arith.constant 0 : index
    %c0_8 = arith.constant 0 : index
    %c0_9 = arith.constant 0 : index
    %13 = vector.load %arg4[%c0_7, %c0_8, %c0_9] : memref<3x4x4xf32, #tpu.memory_space<vmem>>, vector<1x4x4xf32>
    %14 = vector.shape_cast %13 : vector<1x4x4xf32> to vector<4x4xf32>
    %cst = arith.constant dense<0.000000e+00> : vector<4x16xf32>
    %15 = tpu.matmul %14, %10, %cst {dimension_numbers = #tpu.dot_dimension_numbers<[1], [0], [0], [1], [0, 0, 1, 1], [], []>} : vector<4x4xf32>, vector<4x16xf32>, vector<4x16xf32> -> vector<4x16xf32>
    %c1 = arith.constant 1 : index
    %c0_10 = arith.constant 0 : index
    %c0_11 = arith.constant 0 : index
    %16 = vector.load %arg4[%c1, %c0_10, %c0_11] : memref<3x4x4xf32, #tpu.memory_space<vmem>>, vector<1x4x4xf32>
    %17 = vector.shape_cast %16 : vector<1x4x4xf32> to vector<4x4xf32>
    %cst_12 = arith.constant dense<0.000000e+00> : vector<4x16xf32>
    %18 = tpu.matmul %17, %4, %cst_12 {dimension_numbers = #tpu.dot_dimension_numbers<[1], [0], [0], [1], [0, 0, 1, 1], [], []>} : vector<4x4xf32>, vector<4x16xf32>, vector<4x16xf32> -> vector<4x16xf32>
    %19 = arith.addf %15, %18 : vector<4x16xf32>
    %c2 = arith.constant 2 : index
    %c0_13 = arith.constant 0 : index
    %c0_14 = arith.constant 0 : index
    %20 = vector.load %arg4[%c2, %c0_13, %c0_14] : memref<3x4x4xf32, #tpu.memory_space<vmem>>, vector<1x4x4xf32>
    %21 = vector.shape_cast %20 : vector<1x4x4xf32> to vector<4x4xf32>
    %cst_15 = arith.constant dense<0.000000e+00> : vector<4x16xf32>
    %22 = tpu.matmul %21, %12, %cst_15 {dimension_numbers = #tpu.dot_dimension_numbers<[1], [0], [0], [1], [0, 0, 1, 1], [], []>} : vector<4x4xf32>, vector<4x16xf32>, vector<4x16xf32> -> vector<4x16xf32>
    %23 = arith.addf %19, %22 : vector<4x16xf32>
    %c0_16 = arith.constant 0 : index
    %c0_17 = arith.constant 0 : index
    %24 = vector.load %arg5[%c0_16, %c0_17] : memref<4x1xf32, #tpu.memory_space<vmem>>, vector<4x1xf32>
    %25 = vector.broadcast %24 : vector<4x1xf32> to vector<4x16xf32>
    %26 = arith.addf %23, %25 : vector<4x16xf32>
    %27 = arith.addf %26, %4 : vector<4x16xf32>
    %cst_18 = arith.constant 0.000000e+00 : f32
    %28 = vector.broadcast %cst_18 : f32 to vector<4x16xf32>
    %29 = arith.cmpf ogt, %27, %28 : vector<4x16xf32>
    %cst_19 = arith.constant 2.000000e-01 : f32
    %30 = vector.broadcast %cst_19 : f32 to vector<4x16xf32>
    %31 = arith.mulf %30, %27 : vector<4x16xf32>
    %32 = arith.select %29, %27, %31 : vector<4x16xi1>, vector<4x16xf32>
    %c0_20 = arith.constant 0 : index
    %c0_21 = arith.constant 0 : index
    %33 = vector.load %arg7[%c0_20, %c0_21] : memref<4x1xf32, #tpu.memory_space<vmem>>, vector<4x1xf32>
    %cst_22 = arith.constant dense<0.000000e+00> : vector<4xf32>
    %34 = vector.multi_reduction <add>, %32, %cst_22 [1] : vector<4x16xf32> to vector<4xf32>
    %35 = vector.shape_cast %34 : vector<4xf32> to vector<4x1xf32>
    %36 = arith.addf %33, %35 : vector<4x1xf32>
    %c0_23 = arith.constant 0 : index
    %c0_24 = arith.constant 0 : index
    %37 = vector.load %arg7[%c0_23, %c0_24] : memref<4x1xf32, #tpu.memory_space<vmem>>, vector<4x1xf32>
    tpu.vector_store %arg7[%c0_23, %c0_24], %36 {strides = array<i32>} : memref<4x1xf32, #tpu.memory_space<vmem>>, vector<4x1xf32>,
    %c0_25 = arith.constant 0 : index
    %c0_26 = arith.constant 0 : index
    %38 = vector.load %arg8[%c0_25, %c0_26] : memref<4x1xf32, #tpu.memory_space<vmem>>, vector<4x1xf32>
    %39 = arith.mulf %32, %32 : vector<4x16xf32>
    %cst_27 = arith.constant dense<0.000000e+00> : vector<4xf32>
    %40 = vector.multi_reduction <add>, %39, %cst_27 [1] : vector<4x16xf32> to vector<4xf32>
    %41 = vector.shape_cast %40 : vector<4xf32> to vector<4x1xf32>
    %42 = arith.addf %38, %41 : vector<4x1xf32>
    %c0_28 = arith.constant 0 : index
    %c0_29 = arith.constant 0 : index
    %43 = vector.load %arg8[%c0_28, %c0_29] : memref<4x1xf32, #tpu.memory_space<vmem>>, vector<4x1xf32>
    tpu.vector_store %arg8[%c0_28, %c0_29], %42 {strides = array<i32>} : memref<4x1xf32, #tpu.memory_space<vmem>>, vector<4x1xf32>,
    %c0_i32_30 = arith.constant 0 : i32
    %44 = arith.cmpi eq, %arg1, %c0_i32_30 : i32
    %45 = arith.extui %44 : i1 to i32
    %c0_i32_31 = arith.constant 0 : i32
    %46 = arith.cmpi ne, %45, %c0_i32_31 : i32
    scf.if %46 {
      %c0_32 = arith.constant 0 : index
      %c0_33 = arith.constant 0 : index
      %47 = vector.load %arg7[%c0_32, %c0_33] : memref<4x1xf32, #tpu.memory_space<vmem>>, vector<4x1xf32>
      %c0_34 = arith.constant 0 : index
      %c0_35 = arith.constant 0 : index
      %48 = vector.load %arg8[%c0_34, %c0_35] : memref<4x1xf32, #tpu.memory_space<vmem>>, vector<4x1xf32>
      %49 = tpu.concatenate %47, %48 in 1 : vector<4x1xf32>, vector<4x1xf32> -> vector<4x2xf32>
      %c0_36 = arith.constant 0 : index
      %c0_37 = arith.constant 0 : index
      %c0_38 = arith.constant 0 : index
      %50 = vector.load %arg6[%c0_36, %c0_37, %c0_38] : memref<1x4x2xf32, #tpu.memory_space<vmem>>, vector<1x4x2xf32>
      %51 = vector.shape_cast %50 : vector<1x4x2xf32> to vector<4x2xf32>
      %52 = vector.shape_cast %49 : vector<4x2xf32> to vector<1x4x2xf32>
      tpu.vector_store %arg6[%c0_36, %c0_37, %c0_38], %52 {strides = array<i32>} : memref<1x4x2xf32, #tpu.memory_space<vmem>>, vector<1x4x2xf32>,
    } else {
    }
    return
  }
  func.func @transform_0(%arg0: i32, %arg1: i32) -> (i32, i32, i32) {
    %c0_i32 = arith.constant 0 : i32
    %c0_i32_0 = arith.constant 0 : i32
    return %arg0, %c0_i32, %arg1 : i32, i32, i32
  }
  func.func @transform_1(%arg0: i32, %arg1: i32) -> (i32, i32, i32, i32) {
    %c0_i32 = arith.constant 0 : i32
    %c0_i32_0 = arith.constant 0 : i32
    %c0_i32_1 = arith.constant 0 : i32
    return %arg0, %arg1, %c0_i32, %c0_i32_0 : i32, i32, i32, i32
  }
  func.func @transform_2(%arg0: i32, %arg1: i32) -> (i32, i32, i32) {
    %c0_i32 = arith.constant 0 : i32
    %c0_i32_0 = arith.constant 0 : i32
    %c0_i32_1 = arith.constant 0 : i32
    %c0_i32_2 = arith.constant 0 : i32
    return %c0_i32, %c0_i32_0, %c0_i32_1 : i32, i32, i32
  }
  func.func @transform_3(%arg0: i32, %arg1: i32) -> (i32, i32) {
    %c0_i32 = arith.constant 0 : i32
    %c0_i32_0 = arith.constant 0 : i32
    %c0_i32_1 = arith.constant 0 : i32
    return %c0_i32, %c0_i32_0 : i32, i32
  }
  func.func @transform_4(%arg0: i32, %arg1: i32) -> (i32, i32, i32) {
    %c0_i32 = arith.constant 0 : i32
    %c0_i32_0 = arith.constant 0 : i32
    %c0_i32_1 = arith.constant 0 : i32
    return %arg0, %c0_i32, %c0_i32_0 : i32, i32, i32
  }
}

</mosaic_0001>

<llo_original>
// kernel: tpu_custom_call.1
$region0: #{tpu_custom_call.1}
  #allocation0 [shape = 'u32[]', space=smem, size = 0x4, offset = 0x4, fixed_abs, tag = 'smem constant byte address 0x4 - core index']
  #allocation1 [shape = 'u32[144,128]{1,0:T(1,128)}', space=vmem, size = 0x12000, scoped, tag = 'internal scratch']
  #allocation2 [shape = 'f32[4,1]{1,0:T(4,128)}', space=vmem, size = 0x800, scoped, tag = 'scratch operand']
  #allocation3 [shape = 'f32[4,1]{1,0:T(4,128)}', space=vmem, size = 0x800, scoped, tag = 'scratch operand']
  %s0 = inlined_call_operand.hbm [shape: f32[2,4,16], index: 0, kind: input, shape index: {}]
  %s1 = inlined_call_operand.hbm [shape: f32[2,1,4,4], index: 1, kind: input, shape index: {}]
  %s2 = inlined_call_operand.vmem [shape: f32[3,4,4], index: 2, kind: input, shape index: {}]
  %s3 = inlined_call_operand.vmem [shape: f32[4,1], index: 3, kind: input, shape index: {}]
  %s4 = inlined_call_operand.vmem [shape: f32[2,4,2], index: 4, kind: output, shape index: {}]
  %s5 = sld [smem:[#allocation0]]
  $region65: #{tpu_custom_call.1} parent=0
    _
  %s7 = ssub.s32 1, %s5
  %s8 = scalar_select 0, %s7, %s5
  $region1: #{tpu_custom_call.1} parent=0
    #allocation4 [shape = 'u8[4096]{0}', space=vmem, size = 0x1000, scoped, tag = 'input window, operand 0']
    #allocation5 [shape = 's32[2]{0}', space=sflag, size = 0x8, scoped, tag = 'scoped memory for tpu_custom_call.1']
    #allocation6 [shape = 'u8[4096]{0}', space=vmem, size = 0x1000, scoped, tag = 'input window, operand 1']
    #allocation7 [shape = 's32[2]{0}', space=sflag, size = 0x8, scoped, tag = 'scoped memory for tpu_custom_call.1']
    %9 = vsyncpa [#allocation5], 0
    %s10 = scalar_lea.sflag [#allocation5], 1
    %11 = vsyncpa %s10, 0
    %12 = vsyncpa [#allocation7], 0
    %s13 = scalar_lea.sflag [#allocation7], 1
    %14 = vsyncpa %s13, 0
    loop: start=0, step=1, limit=4
    $region2: #{tpu_custom_call.1} parent=1 // loop_pre_header
      _
    $region3: #{tpu_custom_call.1} parent=1 // loop_header
      %s16 = sphi 0, %s20
      %p17 = scmp.ge.s32.totalorder %s16, 4
      %s23 = sphi 0, %s35
      %s24 = sphi 0, %s31
      %s25 = sphi 0, %s23
      %s26 = sphi 0, %s24
      %s27 = sphi 0, %s25
      %s28 = sphi 0, %s26
      %s40 = sphi 0, %s42
      %s43 = sphi 0, %s40
      %s44 = sphi 0, %s43
      %s60 = sphi 0, %s44
      %s68 = sphi 0, %s70
      %s71 = sphi 0, %s68
      %s72 = sphi 0, %s71
      %s88 = sphi 0, %s72
      %s92 = sphi 0, %s92
      %s94 = sphi 0, %s92
      %s95 = sphi 0, %s94
      %s109 = sphi 0, %s95
      %s113 = sphi 0, %s113
      %s115 = sphi 0, %s113
      %s116 = sphi 0, %s115
      %s130 = sphi 0, %s116
      %s136 = sphi 0, %s138
      %s139 = sphi 0, %s136
      %s140 = sphi 0, %s139
      %s156 = sphi 0, %s140
    $region4: #{tpu_custom_call.1} parent=1 // loop_header_branch
      %19 = sbr.rel (%p17) target = $region8
    $region5: #{tpu_custom_call.1} parent=1 // loop_body
      %s21 = ssub.s32 %s16, 1
      %s22 = ssub.s32 %s16, 2
      %s29 = sadd.s32 1, %s24
      %p30 = scmp.ge.s32.totalorder %s29, 1
      %s31 = scalar_select %p30, 0, %s29
      %s32 = sadd.s32 1, %s23
      %s33 = scalar_select %p30, %s32, %s23
      %p34 = scmp.ge.s32.totalorder %s33, 2
      %s35 = scalar_select %p34, 0, %s33
      %s36 = ssub.s32 %s23, %s35
      %s37 = ssub.s32 %s24, %s31
      %s38 = sor.u32 %s36, %s37
      %p39 = scmp.eq.s32.totalorder %s38, 0
      %s41 = sadd.s32 %s40, 1
      %s42 = scalar_select %p39, %s40, %s41
      %p45 = pneg %p39
      %p46 = scmp.eq.s32.totalorder %s16, 1
      %p47 = por %p45, %p46
      %p48 = scmp.ne.s32.totalorder %s40, %s43
      %p49 = scmp.eq.s32.totalorder %s16, 0
      %p50 = por %p48, %p49
      %p51 = scmp.ne.s32.totalorder %s40, %s43
      %p52 = scmp.eq.s32.totalorder %s21, 1
      %p53 = por %p51, %p52
      %p54 = scmp.ne.s32.totalorder %s43, %s44
      %p55 = scmp.eq.s32.totalorder %s21, 0
      %p56 = por %p54, %p55
      %p57 = scmp.ne.s32.totalorder %s43, %s44
      %p58 = scmp.eq.s32.totalorder %s22, 1
      %p59 = por %p57, %p58
      %p61 = scmp.ne.s32.totalorder %s44, %s60
      %p62 = scmp.eq.s32.totalorder %s22, 0
      %p63 = por %p61, %p62
      %s64 = ssub.s32 %s23, %s35
      %s65 = ssub.s32 %s24, %s31
      %s66 = sor.u32 %s64, %s65
      %p67 = scmp.eq.s32.totalorder %s66, 0
      %s69 = sadd.s32 %s68, 1
      %s70 = scalar_select %p67, %s68, %s69
      %p73 = pneg %p67
      %p74 = scmp.eq.s32.totalorder %s16, 1
      %p75 = por %p73, %p74
      %p76 = scmp.ne.s32.totalorder %s68, %s71
      %p77 = scmp.eq.s32.totalorder %s16, 0
      %p78 = por %p76, %p77
      %p79 = scmp.ne.s32.totalorder %s68, %s71
      %p80 = scmp.eq.s32.totalorder %s21, 1
      %p81 = por %p79, %p80
      %p82 = scmp.ne.s32.totalorder %s71, %s72
      %p83 = scmp.eq.s32.totalorder %s21, 0
      %p84 = por %p82, %p83
      %p85 = scmp.ne.s32.totalorder %s71, %s72
      %p86 = scmp.eq.s32.totalorder %s22, 1
      %p87 = por %p85, %p86
      %p89 = scmp.ne.s32.totalorder %s72, %s88
      %p90 = scmp.eq.s32.totalorder %s22, 0
      %p91 = por %p89, %p90
      %s93 = sadd.s32 %s92, 1
      %p96 = scmp.eq.s32.totalorder %s16, 1
      %p97 = scmp.ne.s32.totalorder %s92, %s94
      %p98 = scmp.eq.s32.totalorder %s16, 0
      %p99 = por %p97, %p98
      %p100 = scmp.ne.s32.totalorder %s92, %s94
      %p101 = scmp.eq.s32.totalorder %s21, 1
      %p102 = por %p100, %p101
      %p103 = scmp.ne.s32.totalorder %s94, %s95
      %p104 = scmp.eq.s32.totalorder %s21, 0
      %p105 = por %p103, %p104
      %p106 = scmp.ne.s32.totalorder %s94, %s95
      %p107 = scmp.eq.s32.totalorder %s22, 1
      %p108 = por %p106, %p107
      %p110 = scmp.ne.s32.totalorder %s95, %s109
      %p111 = scmp.eq.s32.totalorder %s22, 0
      %p112 = por %p110, %p111
      %s114 = sadd.s32 %s113, 1
      %p117 = scmp.eq.s32.totalorder %s16, 1
      %p118 = scmp.ne.s32.totalorder %s113, %s115
      %p119 = scmp.eq.s32.totalorder %s16, 0
      %p120 = por %p118, %p119
      %p121 = scmp.ne.s32.totalorder %s113, %s115
      %p122 = scmp.eq.s32.totalorder %s21, 1
      %p123 = por %p121, %p122
      %p124 = scmp.ne.s32.totalorder %s115, %s116
      %p125 = scmp.eq.s32.totalorder %s21, 0
      %p126 = por %p124, %p125
      %p127 = scmp.ne.s32.totalorder %s115, %s116
      %p128 = scmp.eq.s32.totalorder %s22, 1
      %p129 = por %p127, %p128
      %p131 = scmp.ne.s32.totalorder %s116, %s130
      %p132 = scmp.eq.s32.totalorder %s22, 0
      %p133 = por %p131, %p132
      %s134 = ssub.s32 %s23, %s35
      %p135 = scmp.eq.s32.totalorder %s134, 0
      %s137 = sadd.s32 %s136, 1
      %s138 = scalar_select %p135, %s136, %s137
      %p141 = pneg %p135
      %p142 = scmp.eq.s32.totalorder %s16, 1
      %p143 = por %p141, %p142
      %p144 = scmp.ne.s32.totalorder %s136, %s139
      %p145 = scmp.eq.s32.totalorder %s16, 0
      %p146 = por %p144, %p145
      %p147 = scmp.ne.s32.totalorder %s136, %s139
      %p148 = scmp.eq.s32.totalorder %s21, 1
      %p149 = por %p147, %p148
      %p150 = scmp.ne.s32.totalorder %s139, %s140
      %p151 = scmp.eq.s32.totalorder %s21, 0
      %p152 = por %p150, %p151
      %p153 = scmp.ne.s32.totalorder %s139, %s140
      %p154 = scmp.eq.s32.totalorder %s22, 1
      %p155 = por %p153, %p154
      %p157 = scmp.ne.s32.totalorder %s140, %s156
      %p158 = scmp.eq.s32.totalorder %s22, 0
      %p159 = por %p157, %p158
      %p160 = scmp.le.s32.totalorder 1, %s16
      %p161 = scmp.lt.s32.totalorder %s16, 3
      %p162 = pnand %p160, %p161
      %p163 = pneg %p162
      // Predicated region
      $region9: #{tpu_custom_call.1} parent=5 // pred_check
        _
      $region10: #{tpu_custom_call.1} parent=5 // pred_check_branch
        %165 = sbr.rel (%p162) target = $region12
      $region11: #{tpu_custom_call.1} parent=5 // pred_region
        %s166 = ssub.s32 %s16, 1
        // Predicated region
        $region13: #{tpu_custom_call.1} parent=11 // pred_check
          %p167 = pneg %p105
        $region14: #{tpu_custom_call.1} parent=11 // pred_check_branch
          %169 = sbr.rel (%p167) target = $region16
        $region15: #{tpu_custom_call.1} parent=11 // pred_region
          _
        $region16: #{tpu_custom_call.1} parent=11 // pred_fallthru
          _
        // Predicated region
        $region17: #{tpu_custom_call.1} parent=11 // pred_check
          %p170 = pneg %p126
        $region18: #{tpu_custom_call.1} parent=11 // pred_check_branch
          %172 = sbr.rel (%p170) target = $region20
        $region19: #{tpu_custom_call.1} parent=11 // pred_region
          _
        $region20: #{tpu_custom_call.1} parent=11 // pred_fallthru
          _
      $region12: #{tpu_custom_call.1} parent=5 // pred_fallthru
        _
      %p173 = scmp.lt.s32.totalorder %s16, 2
      // Predicated region
      $region21: #{tpu_custom_call.1} parent=5 // pred_check
        %p174 = pneg %p173
      $region22: #{tpu_custom_call.1} parent=5 // pred_check_branch
        %176 = sbr.rel (%p174) target = $region24
      $region23: #{tpu_custom_call.1} parent=5 // pred_region
        // Predicated region
        $region25: #{tpu_custom_call.1} parent=23 // pred_check
          %p177 = pneg %p50
        $region26: #{tpu_custom_call.1} parent=23 // pred_check_branch
          %179 = sbr.rel (%p177) target = $region28
        $region27: #{tpu_custom_call.1} parent=23 // pred_region
          %s180 = sand.u32 %s40, 1
          %s181 = scalar_lea.sflag [#allocation5], %s180
          %s182 = sand.u32 %s40, 1
          %s183 = smul.addr %s182, 4
          %s184 = scalar_lea.vmem [#allocation4], %s183
          %s186 = ssub.s32 64, 64
          %187 = vsyncadd %s181, %s186
          %s188 = sadd.s32 %s24, %s23
          %s189 = smul.addr %s188, 64
          %s190 = scalar_lea.hbm %s0, %s189
          %s192 = sshll.u32 %s184, 4
          %s193 = int_to_ptr.vmem [resolvable:$true] %s192
          %195 = dma.hbm_to_vmem [thread:$0]  %s190, 64, %s193, %s181
        $region28: #{tpu_custom_call.1} parent=23 // pred_fallthru
          _
        // Predicated region
        $region29: #{tpu_custom_call.1} parent=23 // pred_check
          %p196 = pneg %p78
        $region30: #{tpu_custom_call.1} parent=23 // pred_check_branch
          %198 = sbr.rel (%p196) target = $region32
        $region31: #{tpu_custom_call.1} parent=23 // pred_region
          %s199 = sand.u32 %s68, 1
          %s200 = scalar_lea.sflag [#allocation7], %s199
          %s201 = sand.u32 %s68, 1
          %s202 = smul.addr %s201, 4
          %s203 = scalar_lea.vmem [#allocation6], %s202
          %s205 = ssub.s32 64, 64
          %206 = vsyncadd %s200, %s205
          %s207 = sadd.s32 %s24, %s23
          %s208 = smul.addr %s207, 64
          %s209 = scalar_lea.hbm %s1, %s208
          %s211 = sshll.u32 %s203, 4
          %s212 = int_to_ptr.vmem [resolvable:$true] %s211
          %214 = dma.hbm_to_vmem [thread:$0]  %s209, 64, %s212, %s200
        $region32: #{tpu_custom_call.1} parent=23 // pred_fallthru
          _
      $region24: #{tpu_custom_call.1} parent=5 // pred_fallthru
        _
      %p215 = scmp.le.s32.totalorder 1, %s16
      %p216 = scmp.lt.s32.totalorder %s16, 3
      %p217 = pnand %p215, %p216
      %p218 = pneg %p217
      // Predicated region
      $region33: #{tpu_custom_call.1} parent=5 // pred_check
        _
      $region34: #{tpu_custom_call.1} parent=5 // pred_check_branch
        %220 = sbr.rel (%p217) target = $region36
      $region35: #{tpu_custom_call.1} parent=5 // pred_region
        %s221 = ssub.s32 %s16, 1
        %s222 = sand.u32 %s43, 1
        %s223 = scalar_lea.sflag [#allocation5], %s222
        %s224 = sand.u32 %s43, 1
        %s225 = smul.addr %s224, 4
        %s226 = scalar_lea.vmem [#allocation4], %s225
        // Predicated region
        $region37: #{tpu_custom_call.1} parent=35 // pred_check
          %p227 = pneg %p56
        $region38: #{tpu_custom_call.1} parent=35 // pred_check_branch
          %229 = sbr.rel (%p227) target = $region40
        $region39: #{tpu_custom_call.1} parent=35 // pred_region
          %230 = dma.done %s223, 64
        $region40: #{tpu_custom_call.1} parent=35 // pred_fallthru
          _
        %s231 = sand.u32 %s71, 1
        %s232 = scalar_lea.sflag [#allocation7], %s231
        %s233 = sand.u32 %s71, 1
        %s234 = smul.addr %s233, 4
        %s235 = scalar_lea.vmem [#allocation6], %s234
        // Predicated region
        $region41: #{tpu_custom_call.1} parent=35 // pred_check
          %p236 = pneg %p84
        $region42: #{tpu_custom_call.1} parent=35 // pred_check_branch
          %238 = sbr.rel (%p236) target = $region44
        $region43: #{tpu_custom_call.1} parent=35 // pred_region
          %239 = dma.done %s232, 64
        $region44: #{tpu_custom_call.1} parent=35 // pred_fallthru
          _
        %s240 = sand.u32 %s43, 1
        %s241 = scalar_lea.sflag [#allocation5], %s240
        %s242 = sand.u32 %s43, 1
        %s243 = smul.addr %s242, 4
        %s244 = scalar_lea.vmem [#allocation4], %s243
        %p245 = pneg %p56
        %p246 = pneg %p53
        %s247 = sand.u32 %s71, 1
        %s248 = scalar_lea.sflag [#allocation7], %s247
        %s249 = sand.u32 %s71, 1
        %s250 = smul.addr %s249, 4
        %s251 = scalar_lea.vmem [#allocation6], %s250
        %p252 = pneg %p84
        %p253 = pneg %p81
        %p254 = pneg %p105
        %p255 = pneg %p102
        %p256 = pneg %p126
        %p257 = pneg %p123
        %p258 = pneg %p152
        %p259 = pneg %p149
        %p260 = scmp.lt.s32.totalorder %s25, 1
        %s261 = scalar_select %p260, %s25, 1
        %s262 = smul.addr %s261, 4
        %s263 = scalar_lea.vmem %s4, %s262
        %p264 = scmp.lt.s32.totalorder %s25, 1
        %s265 = scalar_select %p264, %s25, 1
        %s266 = smul.addr %s265, 4
        %s267 = scalar_lea.vmem %s4, %s266
        %p268 = scmp.eq.s32.totalorder %s26, 0
        // Predicated region
        $region45: #{tpu_custom_call.1} parent=35 // pred_check
          %p269 = pneg %p268
        $region46: #{tpu_custom_call.1} parent=35 // pred_check_branch
          %271 = sbr.rel (%p269) target = $region48
        $region47: #{tpu_custom_call.1} parent=35 // pred_region
          %vm272 = vcmask 3072
          %273 = vst.msk [vmem:[#allocation2] sm:$0xf] %vm272, 0.0
          %274 = vst.msk [vmem:[#allocation3] sm:$0xf] %vm272, 0.0
        $region48: #{tpu_custom_call.1} parent=35 // pred_fallthru
          _
        %v275 = vld [vmem:[%s226] sm:$0xf]
        %v276 = vld [vmem:[%s235] sm:$0xf]
        %278 = vrot.lane.b32.xlu0 %v275, 2
        %v279 = vpop.permute.xlu0 %278
        %vm281 = vcmask 15360
        %v282 = vsel %vm281, %v276, %v279
        %283 = vrot.lane.b32.xlu0 %v275, 126
        %v284 = vpop.permute.xlu0 %283
        %287 = vrot.lane.b32.xlu0 %v276, 12
        %v288 = vpop.permute.xlu0 %287
        %vm290 = vcmask 113664
        %v291 = vsel %vm290, %v284, %v288
        %v292 = vld [vmem:[%s2] sm:$0xf]
        %s293 = scalar_lea.vmem %s2, 4
        %v294 = vld [vmem:[%s293] sm:$0xf]
        %vm295 = vcmask 31744
        %v297 = vsel %vm295, %v294, 0
        %vm299 = vcmask 1043456
        %v300 = vsel %vm299, %v275, 0
        %302 = vmatprep.subr.mxu0 0.0
        %303 = vmatpush1.msra.mxu0 %v300
        %304 = vmatprep.subr.mxu0 0.0
        %305 = vmatpush1.msra.mxu0 0.0
        %306 = vmatprep.subr.mxu0 0.0
        %307 = vmatpush1.msra.mxu0 0.0
        %308 = vmatprep.subr.mxu0 0.0
        %309 = vmatpush1.msra.mxu0 0.0
        %310 = vmatprep.subr.mxu0 0.0
        %311 = vmatpush1.msra.mxu0 0.0
        %312 = vmatprep.subr.mxu0 0.0
        %313 = vmatpush1.msra.mxu0 0.0
        %314 = vmatprep.subr.mxu0 0.0
        %315 = vmatpush1.msra.mxu0 0.0
        %316 = vmatprep.subr.mxu0 0.0
        %317 = vmatpush1.msra.mxu0 0.0
        %318 = vmatprep.subr.mxu0 0.0
        %319 = vmatpush1.msra.mxu0 0.0
        %320 = vmatprep.subr.mxu0 0.0
        %321 = vmatpush1.msra.mxu0 0.0
        %322 = vmatprep.subr.mxu0 0.0
        %323 = vmatpush1.msra.mxu0 0.0
        %324 = vmatprep.subr.mxu0 0.0
        %325 = vmatpush1.msra.mxu0 0.0
        %326 = vmatprep.subr.mxu0 0.0
        %327 = vmatpush1.msra.mxu0 0.0
        %328 = vmatprep.subr.mxu0 0.0
        %329 = vmatpush1.msra.mxu0 0.0
        %330 = vmatprep.subr.mxu0 0.0
        %331 = vmatpush1.msra.mxu0 0.0
        %332 = vmatprep.subr.mxu0 0.0
        %333 = vmatpush1.msra.mxu0 0.0
        %334 = vmatprep.subr.mxu0 0.0
        %335 = vmatpush1.msra.mxu0 0.0
        %336 = vmatprep.subr.mxu0 0.0
        %337 = vmatpush1.msra.mxu0 0.0
        %338 = vmatprep.subr.mxu0 0.0
        %339 = vmatpush1.msra.mxu0 0.0
        %340 = vmatprep.subr.mxu0 0.0
        %341 = vmatpush1.msra.mxu0 0.0
        %342 = vmatprep.subr.mxu0 0.0
        %343 = vmatpush1.msra.mxu0 0.0
        %344 = vmatprep.subr.mxu0 0.0
        %345 = vmatpush1.msra.mxu0 0.0
        %346 = vmatprep.subr.mxu0 0.0
        %347 = vmatpush1.msra.mxu0 0.0
        %348 = vmatprep.subr.mxu0 0.0
        %349 = vmatpush1.msra.mxu0 0.0
        %350 = vmatprep.subr.mxu0 0.0
        %351 = vmatpush1.msra.mxu0 0.0
        %352 = vmatprep.subr.mxu0 0.0
        %353 = vmatpush1.msra.mxu0 0.0
        %354 = vmatprep.subr.mxu0 0.0
        %355 = vmatpush1.msra.mxu0 0.0
        %356 = vmatprep.subr.mxu0 0.0
        %357 = vmatpush1.msra.mxu0 0.0
        %358 = vmatprep.subr.mxu0 0.0
        %359 = vmatpush1.msra.mxu0 0.0
        %360 = vmatprep.subr.mxu0 0.0
        %361 = vmatpush1.msra.mxu0 0.0
        %362 = vmatprep.subr.mxu0 0.0
        %363 = vmatpush1.msra.mxu0 0.0
        %364 = vmatprep.subr.mxu0 0.0
        %365 = vmatpush1.msra.mxu0 0.0
        %366 = vmatprep.mubr.f32.mxu0 0.0
        %367 = vmatmul.mubr.f32.gmra.mrb[0].mxu0 %v297
        %v368 = vpop.f32.mrb[0].mxu0
        %v369 = vadd.f32 0.0, %v368
        %v370 = vpop.f32.mrb[0].mxu0
        %371 = vdwg.mxu0
        %v373 = vsel %vm295, %v292, 0
        %v376 = vsel %vm299, %v282, 0
        %378 = vmatprep.subr.mxu0 0.0
        %379 = vmatpush1.msra.mxu0 %v376
        %380 = vmatprep.subr.mxu0 0.0
        %381 = vmatpush1.msra.mxu0 0.0
        %382 = vmatprep.subr.mxu0 0.0
        %383 = vmatpush1.msra.mxu0 0.0
        %384 = vmatprep.subr.mxu0 0.0
        %385 = vmatpush1.msra.mxu0 0.0
        %386 = vmatprep.subr.mxu0 0.0
        %387 = vmatpush1.msra.mxu0 0.0
        %388 = vmatprep.subr.mxu0 0.0
        %389 = vmatpush1.msra.mxu0 0.0
        %390 = vmatprep.subr.mxu0 0.0
        %391 = vmatpush1.msra.mxu0 0.0
        %392 = vmatprep.subr.mxu0 0.0
        %393 = vmatpush1.msra.mxu0 0.0
        %394 = vmatprep.subr.mxu0 0.0
        %395 = vmatpush1.msra.mxu0 0.0
        %396 = vmatprep.subr.mxu0 0.0
        %397 = vmatpush1.msra.mxu0 0.0
        %398 = vmatprep.subr.mxu0 0.0
        %399 = vmatpush1.msra.mxu0 0.0
        %400 = vmatprep.subr.mxu0 0.0
        %401 = vmatpush1.msra.mxu0 0.0
        %402 = vmatprep.subr.mxu0 0.0
        %403 = vmatpush1.msra.mxu0 0.0
        %404 = vmatprep.subr.mxu0 0.0
        %405 = vmatpush1.msra.mxu0 0.0
        %406 = vmatprep.subr.mxu0 0.0
        %407 = vmatpush1.msra.mxu0 0.0
        %408 = vmatprep.subr.mxu0 0.0
        %409 = vmatpush1.msra.mxu0 0.0
        %410 = vmatprep.subr.mxu0 0.0
        %411 = vmatpush1.msra.mxu0 0.0
        %412 = vmatprep.subr.mxu0 0.0
        %413 = vmatpush1.msra.mxu0 0.0
        %414 = vmatprep.subr.mxu0 0.0
        %415 = vmatpush1.msra.mxu0 0.0
        %416 = vmatprep.subr.mxu0 0.0
        %417 = vmatpush1.msra.mxu0 0.0
        %418 = vmatprep.subr.mxu0 0.0
        %419 = vmatpush1.msra.mxu0 0.0
        %420 = vmatprep.subr.mxu0 0.0
        %421 = vmatpush1.msra.mxu0 0.0
        %422 = vmatprep.subr.mxu0 0.0
        %423 = vmatpush1.msra.mxu0 0.0
        %424 = vmatprep.subr.mxu0 0.0
        %425 = vmatpush1.msra.mxu0 0.0
        %426 = vmatprep.subr.mxu0 0.0
        %427 = vmatpush1.msra.mxu0 0.0
        %428 = vmatprep.subr.mxu0 0.0
        %429 = vmatpush1.msra.mxu0 0.0
        %430 = vmatprep.subr.mxu0 0.0
        %431 = vmatpush1.msra.mxu0 0.0
        %432 = vmatprep.subr.mxu0 0.0
        %433 = vmatpush1.msra.mxu0 0.0
        %434 = vmatprep.subr.mxu0 0.0
        %435 = vmatpush1.msra.mxu0 0.0
        %436 = vmatprep.subr.mxu0 0.0
        %437 = vmatpush1.msra.mxu0 0.0
        %438 = vmatprep.subr.mxu0 0.0
        %439 = vmatpush1.msra.mxu0 0.0
        %440 = vmatprep.subr.mxu0 0.0
        %441 = vmatpush1.msra.mxu0 0.0
        %442 = vmatprep.mubr.f32.mxu0 0.0
        %443 = vmatmul.mubr.f32.gmra.mrb[0].mxu0 %v373
        %v444 = vpop.f32.mrb[0].mxu0
        %v445 = vadd.f32 %v369, %v444
        %v446 = vpop.f32.mrb[0].mxu0
        %447 = vdwg.mxu0
        %s448 = scalar_lea.vmem %s2, 8
        %v449 = vld [vmem:[%s448] sm:$0xf]
        %v451 = vsel %vm295, %v449, 0
        %v454 = vsel %vm299, %v291, 0
        %456 = vmatprep.subr.mxu0 0.0
        %457 = vmatpush1.msra.mxu0 %v454
        %458 = vmatprep.subr.mxu0 0.0
        %459 = vmatpush1.msra.mxu0 0.0
        %460 = vmatprep.subr.mxu0 0.0
        %461 = vmatpush1.msra.mxu0 0.0
        %462 = vmatprep.subr.mxu0 0.0
        %463 = vmatpush1.msra.mxu0 0.0
        %464 = vmatprep.subr.mxu0 0.0
        %465 = vmatpush1.msra.mxu0 0.0
        %466 = vmatprep.subr.mxu0 0.0
        %467 = vmatpush1.msra.mxu0 0.0
        %468 = vmatprep.subr.mxu0 0.0
        %469 = vmatpush1.msra.mxu0 0.0
        %470 = vmatprep.subr.mxu0 0.0
        %471 = vmatpush1.msra.mxu0 0.0
        %472 = vmatprep.subr.mxu0 0.0
        %473 = vmatpush1.msra.mxu0 0.0
        %474 = vmatprep.subr.mxu0 0.0
        %475 = vmatpush1.msra.mxu0 0.0
        %476 = vmatprep.subr.mxu0 0.0
        %477 = vmatpush1.msra.mxu0 0.0
        %478 = vmatprep.subr.mxu0 0.0
        %479 = vmatpush1.msra.mxu0 0.0
        %480 = vmatprep.subr.mxu0 0.0
        %481 = vmatpush1.msra.mxu0 0.0
        %482 = vmatprep.subr.mxu0 0.0
        %483 = vmatpush1.msra.mxu0 0.0
        %484 = vmatprep.subr.mxu0 0.0
        %485 = vmatpush1.msra.mxu0 0.0
        %486 = vmatprep.subr.mxu0 0.0
        %487 = vmatpush1.msra.mxu0 0.0
        %488 = vmatprep.subr.mxu0 0.0
        %489 = vmatpush1.msra.mxu0 0.0
        %490 = vmatprep.subr.mxu0 0.0
        %491 = vmatpush1.msra.mxu0 0.0
        %492 = vmatprep.subr.mxu0 0.0
        %493 = vmatpush1.msra.mxu0 0.0
        %494 = vmatprep.subr.mxu0 0.0
        %495 = vmatpush1.msra.mxu0 0.0
        %496 = vmatprep.subr.mxu0 0.0
        %497 = vmatpush1.msra.mxu0 0.0
        %498 = vmatprep.subr.mxu0 0.0
        %499 = vmatpush1.msra.mxu0 0.0
        %500 = vmatprep.subr.mxu0 0.0
        %501 = vmatpush1.msra.mxu0 0.0
        %502 = vmatprep.subr.mxu0 0.0
        %503 = vmatpush1.msra.mxu0 0.0
        %504 = vmatprep.subr.mxu0 0.0
        %505 = vmatpush1.msra.mxu0 0.0
        %506 = vmatprep.subr.mxu0 0.0
        %507 = vmatpush1.msra.mxu0 0.0
        %508 = vmatprep.subr.mxu0 0.0
        %509 = vmatpush1.msra.mxu0 0.0
        %510 = vmatprep.subr.mxu0 0.0
        %511 = vmatpush1.msra.mxu0 0.0
        %512 = vmatprep.subr.mxu0 0.0
        %513 = vmatpush1.msra.mxu0 0.0
        %514 = vmatprep.subr.mxu0 0.0
        %515 = vmatpush1.msra.mxu0 0.0
        %516 = vmatprep.subr.mxu0 0.0
        %517 = vmatpush1.msra.mxu0 0.0
        %518 = vmatprep.subr.mxu0 0.0
        %519 = vmatpush1.msra.mxu0 0.0
        %520 = vmatprep.mubr.f32.mxu0 0.0
        %521 = vmatmul.mubr.f32.gmra.mrb[0].mxu0 %v451
        %v522 = vpop.f32.mrb[0].mxu0
        %v523 = vadd.f32 0.0, %v522
        %v524 = vpop.f32.mrb[0].mxu0
        %525 = vdwg.mxu0
        %v526 = vadd.f32 %v445, %v523
        %v527 = vld [vmem:[%s3] sm:$0xf]
        %529 = vset.pattern.permute.xlu0 0
        %530 = vperm.xlu0 %529, %v527
        %v531 = vpop.permute.xlu0 %530
        %v533 = vadd.f32 %v526, %v531
        %v534 = vadd.f32 %v533, %v275
        %vm535 = vcmp.gt.f32.partialorder %v534, 0.0
        %v536 = vmul.f32 %v534, 0.2
        %v537 = vsel %vm535, %v534, %v536
        %v538 = vld [vmem:[#allocation2] sm:$0xf]
        %vm539 = vcmask 125952
        %v540 = vsel %vm539, %v537, 0.0
        %541 = vadd.xlane.f32.xlu0 %v540
        %v542 = vpop.xlane.xlu0 %541
        %v543 = vadd.f32 %v538, %v542
        %vm544 = vcmask 3072
        %545 = vst.msk [vmem:[#allocation2] sm:$0xf] %vm544, %v543
        %v546 = vld [vmem:[#allocation3] sm:$0xf]
        %v547 = vmul.f32 %v537, %v537
        %v548 = vsel %vm539, %v547, 0.0
        %549 = vadd.xlane.f32.xlu0 %v548
        %v550 = vpop.xlane.xlu0 %549
        %v551 = vadd.f32 %v546, %v550
        %552 = vst.msk [vmem:[#allocation3] sm:$0xf] %vm544, %v551
        // Predicated region
        $region49: #{tpu_custom_call.1} parent=35 // pred_check
          %p553 = pneg %p268
        $region50: #{tpu_custom_call.1} parent=35 // pred_check_branch
          %555 = sbr.rel (%p553) target = $region52
        $region51: #{tpu_custom_call.1} parent=35 // pred_region
          %v556 = vld [vmem:[#allocation2] sm:$0xf]
          %v557 = vld [vmem:[#allocation3] sm:$0xf]
          %559 = vrot.lane.b32.xlu0 %v557, 1
          %v560 = vpop.permute.xlu0 %559
          %vm562 = vcmask 7168
          %v563 = vsel %vm562, %v556, %v560
          %vm564 = vcmask 11264
          %565 = vst.msk [vmem:[%s267] sm:$0xf] %vm564, %v563
        $region52: #{tpu_custom_call.1} parent=35 // pred_fallthru
          _
        %p566 = scmp.lt.s32.totalorder %s25, 1
        %s567 = scalar_select %p566, %s25, 1
        %s568 = smul.addr %s567, 4
        %s569 = scalar_lea.vmem %s4, %s568
        // Predicated region
        $region53: #{tpu_custom_call.1} parent=35 // pred_check
          %p570 = pneg %p149
        $region54: #{tpu_custom_call.1} parent=35 // pred_check_branch
          %572 = sbr.rel (%p570) target = $region56
        $region55: #{tpu_custom_call.1} parent=35 // pred_region
          _
        $region56: #{tpu_custom_call.1} parent=35 // pred_fallthru
          _
      $region36: #{tpu_custom_call.1} parent=5 // pred_fallthru
        _
      %p573 = scmp.le.s32.totalorder 2, %s16
      // Predicated region
      $region57: #{tpu_custom_call.1} parent=5 // pred_check
        %p574 = pneg %p573
      $region58: #{tpu_custom_call.1} parent=5 // pred_check_branch
        %576 = sbr.rel (%p574) target = $region60
      $region59: #{tpu_custom_call.1} parent=5 // pred_region
        %s577 = ssub.s32 %s16, 2
        // Predicated region
        $region61: #{tpu_custom_call.1} parent=59 // pred_check
          %p578 = pneg %p155
        $region62: #{tpu_custom_call.1} parent=59 // pred_check_branch
          %580 = sbr.rel (%p578) target = $region64
        $region63: #{tpu_custom_call.1} parent=59 // pred_region
          %p581 = scmp.lt.s32.totalorder %s27, 1
          %s582 = scalar_select %p581, %s27, 1
          %s583 = smul.addr %s582, 4
          %s584 = scalar_lea.vmem %s4, %s583
        $region64: #{tpu_custom_call.1} parent=59 // pred_fallthru
          _
      $region60: #{tpu_custom_call.1} parent=5 // pred_fallthru
        _
    $region6: #{tpu_custom_call.1} parent=1 // loop_footer
      %s20 = sadd.s32 1, %s16
    $region7: #{tpu_custom_call.1} parent=1 // loop_footer_branch
      %15 = sbr.rel target = $region3
    $region8: #{tpu_custom_call.1} parent=1 // loop_exit
      _
    %585 = vsyncpa [#allocation5], 1
    %s586 = scalar_lea.sflag [#allocation5], 1
    %587 = vsyncpa %s586, 1
    %588 = vsyncpa [#allocation7], 1
    %s589 = scalar_lea.sflag [#allocation7], 1
    %590 = vsyncpa %s589, 1

</llo_original>
